<compile_context>
chip_gen: v6e
topology: v6e:2x2x1
jax: 0.10.0
libtpu: 0.0.40
codegen_flags: <defaults>
</compile_context>

<pallas_src>
import functools

import jax
import jax.numpy as jnp
from jax.experimental import pallas as pl
from jax.experimental.pallas import tpu as pltpu

LANES = 128
SUBLANES = 8
# ~2 MiB of input bytes per DMA buffer per grid step.
# 2 inputs x 2 pipeline buffers x 2 MiB = 8 MiB of streaming VMEM.
TARGET_BYTES_PER_BUFFER = 2 << 20
# Raised scoped-VMEM limit: covers the streamed buffers + f32 upcast
# intermediates on every generation, and stays well under v7x's 64 MiB
# physical VMEM (v5e/v6e have 128 MiB physical).
VMEM_LIMIT_BYTES = 48 << 20


def _sq_diff(pred_ref, tgt_ref):
    # Upcast in-kernel (cheap VPU work) so bf16 inputs travel HBM at half width.
    d = pred_ref[...].astype(jnp.float32) - tgt_ref[...].astype(jnp.float32)
    return d * d


def _mse_single_block_kernel(pred_ref, tgt_ref, out_ref):
    # Single block covers the whole (rows, lane) array; one cross-sublane
    # reduce here is negligible.
    out_ref[...] = jnp.sum(_sq_diff(pred_ref, tgt_ref), axis=0, keepdims=True)


def _mse_partial_kernel(pred_ref, tgt_ref, out_ref, *, block_rows, lane,
                        total_rows, need_mask):
    sq = _sq_diff(pred_ref, tgt_ref)

    def group_sum(x):
        # (block_rows, lane) -> (block_rows//8, 8, lane) -> sum over leading
        # axis: pure vreg-aligned VPU adds (whole row-tiles added together),
        # no cross-lane/sublane XLU reduce in the steady state.  The single
        # scalar reduce happens once, outside the kernel.
        return jnp.sum(x.reshape(block_rows // SUBLANES, SUBLANES, lane), axis=0)

    if need_mask:
        i = pl.program_id(0)
        is_last = i == pl.num_programs(0) - 1

        # Steady-state blocks: no masking work at all.
        @pl.when(jnp.logical_not(is_last))
        def _():
            out_ref[...] = group_sum(sq)

        # Only the (single) ragged last block pays for iota/compare/select.
        @pl.when(is_last)
        def _():
            rows_left = total_rows - i * block_rows
            row_ids = jax.lax.broadcasted_iota(jnp.int32, (block_rows, lane), 0)
            # select (not multiply) so NaN/Inf garbage in padded rows is safe.
            out_ref[...] = group_sum(
                jnp.where(row_ids < rows_left, sq, jnp.float32(0.0)))
    else:
        out_ref[...] = group_sum(sq)


def mse_loss_pallas(pred, target):
    """criterion: PyTorch nn.MSELoss (mean reduction) over all elements."""
    assert pred.shape == target.shape, (pred.shape, target.shape)
    total_elems = int(pred.size)
    if total_elems == 0:
        return jnp.float32(0.0)

    # Bring both operands to 2-D WITHOUT touching the trailing (lane) dim so
    # the TPU (8,128)-tiled HBM layout is preserved (no relayout copy in front
    # of the kernel in the common case).
    if pred.ndim == 0:
        p2d, t2d = pred.reshape(1, 1), target.reshape(1, 1)
    elif pred.ndim == 1:
        p2d, t2d = pred.reshape(1, -1), target.reshape(1, -1)
    else:
        lane_dim = pred.shape[-1]
        p2d, t2d = pred.reshape(-1, lane_dim), target.reshape(-1, lane_dim)
    rows, lane = p2d.shape

    # Dtype-aware block sizing: ~TARGET_BYTES_PER_BUFFER of input bytes per
    # buffer, rows aligned to the packed sublane tile (8 f32 / 16 bf16 / 32 i8).
    itemsize = max(jnp.dtype(p2d.dtype).itemsize, jnp.dtype(t2d.dtype).itemsize)
    row_align = SUBLANES * max(1, 4 // itemsize)
    padded_lane = pl.cdiv(lane, LANES) * LANES           # VMEM lane padding
    budget_rows = TARGET_BYTES_PER_BUFFER // (padded_lane * itemsize)
    budget_rows = max(row_align, (budget_rows // row_align) * row_align)

    n_bytes = total_elems * itemsize
    cost = pl.CostEstimate(flops=3 * total_elems, transcendentals=0,
                           bytes_accessed=2 * n_bytes + 4 * padded_lane)

    if rows <= budget_rows:
        # Single block covering the whole array (block dims == full array dims
        # are always legal, even when `rows` is not a multiple of 8).
        partials = pl.pallas_call(
            _mse_single_block_kernel,
            out_shape=jax.ShapeDtypeStruct((1, lane), jnp.float32),
            grid_spec=pltpu.PrefetchScalarGridSpec(
                num_scalar_prefetch=0,
                grid=(1,),
                in_specs=[pl.BlockSpec((rows, lane), lambda i: (0, 0)),
                          pl.BlockSpec((rows, lane), lambda i: (0, 0))],
                out_specs=pl.BlockSpec((1, lane), lambda i: (0, 0)),
            ),
            compiler_params=pltpu.CompilerParams(
                dimension_semantics=("arbitrary",),
                vmem_limit_bytes=VMEM_LIMIT_BYTES,
            ),
            cost_estimate=cost,
        )(p2d, t2d)
    else:
        block_rows = budget_rows
        num_blocks = pl.cdiv(rows, block_rows)
        need_mask = (rows % block_rows) != 0
        kernel = functools.partial(
            _mse_partial_kernel, block_rows=block_rows, lane=lane,
            total_rows=rows, need_mask=need_mask)
        partials = pl.pallas_call(
            kernel,
            out_shape=jax.ShapeDtypeStruct((num_blocks * SUBLANES, lane),
                                           jnp.float32),
            grid_spec=pltpu.PrefetchScalarGridSpec(
                num_scalar_prefetch=0,
                grid=(num_blocks,),
                in_specs=[pl.BlockSpec((block_rows, lane), lambda i: (i, 0)),
                          pl.BlockSpec((block_rows, lane), lambda i: (i, 0))],
                out_specs=pl.BlockSpec((SUBLANES, lane), lambda i: (i, 0)),
            ),
            compiler_params=pltpu.CompilerParams(
                # No carried state (per-block partials), so the grid axis is
                # parallel and v7x can shard it across both TensorCores.
                dimension_semantics=("parallel",),
                vmem_limit_bytes=VMEM_LIMIT_BYTES,
            ),
            cost_estimate=cost,
        )(p2d, t2d)

    # Tiny follow-up reduce (at most (num_blocks*8, lane) f32) + mean divide.
    return jnp.sum(partials) / jnp.float32(total_elems)


class LossPrinter:
    """Mirror of the PyTorch LossPrinter: wraps a criterion, prints the loss."""

    def __init__(self, criterion):
        self.criterion = criterion

    def __call__(self, *args, **kwargs):
        loss = self.criterion(*args, **kwargs)
        # Matches `print('Loss: %f' % loss)` in the PyTorch module.
        print('Loss: %f' % float(loss))
        return loss


if __name__ == "__main__":
    key = jax.random.PRNGKey(0)
    k1, k2 = jax.random.split(key)
    # Small NCHW inputs: batch=2, channels=4, spatial=16x16.
    pred = jax.random.normal(k1, (2, 4, 16, 16), dtype=jnp.float32)
    target = jax.random.normal(k2, (2, 4, 16, 16), dtype=jnp.float32)

    loss_printer = LossPrinter(mse_loss_pallas)
    loss = loss_printer(pred, target)
    jax.block_until_ready(loss)

    # Sanity check against plain-JAX reference.
    ref = jnp.mean((pred - target) ** 2)
    assert abs(float(loss) - float(ref)) < 1e-5, (float(loss), float(ref))
    print("KERNEL_OK")
</pallas_src>

<mosaic_0001>
module attributes {stable_mosaic.version = 11 : i64} {
  func.func @_mse_single_block_kernel(%arg0: i32, %arg1: memref<128x16xf32, #tpu.memory_space<vmem>>, %arg2: memref<128x16xf32, #tpu.memory_space<vmem>>, %arg3: memref<1x16xf32, #tpu.memory_space<vmem>>) attributes {dimension_semantics = [#tpu.dimension_semantics<arbitrary>], iteration_bounds = array<i64: 1>, scalar_prefetch = 0 : i64, scratch_operands = 0 : i64, tpu.core_type = #tpu.core_type<tc>, window_params = [{pipeline_mode = #tpu.pipeline_mode<synchronous>, transform_indices = @transform_0, window_bounds = array<i64: 128, 16>}, {pipeline_mode = #tpu.pipeline_mode<synchronous>, transform_indices = @transform_1, window_bounds = array<i64: 128, 16>}, {pipeline_mode = #tpu.pipeline_mode<synchronous>, transform_indices = @transform_2, window_bounds = array<i64: 1, 16>}]} {
    %c0 = arith.constant 0 : index
    %c0_0 = arith.constant 0 : index
    %0 = vector.load %arg1[%c0, %c0_0] : memref<128x16xf32, #tpu.memory_space<vmem>>, vector<128x16xf32>
    %c0_1 = arith.constant 0 : index
    %c0_2 = arith.constant 0 : index
    %1 = vector.load %arg2[%c0_1, %c0_2] : memref<128x16xf32, #tpu.memory_space<vmem>>, vector<128x16xf32>
    %2 = arith.subf %0, %1 : vector<128x16xf32>
    %3 = arith.mulf %2, %2 : vector<128x16xf32>
    %cst = arith.constant dense<0.000000e+00> : vector<16xf32>
    %4 = vector.multi_reduction <add>, %3, %cst [0] : vector<128x16xf32> to vector<16xf32>
    %5 = vector.shape_cast %4 : vector<16xf32> to vector<1x16xf32>
    %c0_3 = arith.constant 0 : index
    %c0_4 = arith.constant 0 : index
    %6 = vector.load %arg3[%c0_3, %c0_4] : memref<1x16xf32, #tpu.memory_space<vmem>>, vector<1x16xf32>
    tpu.vector_store %arg3[%c0_3, %c0_4], %5 {strides = array<i32>} : memref<1x16xf32, #tpu.memory_space<vmem>>, vector<1x16xf32>,
    return
  }
  func.func @transform_0(%arg0: i32) -> (i32, i32) {
    %c0_i32 = arith.constant 0 : i32
    %c0_i32_0 = arith.constant 0 : i32
    %c0_i32_1 = arith.constant 0 : i32
    return %c0_i32, %c0_i32_0 : i32, i32
  }
  func.func @transform_1(%arg0: i32) -> (i32, i32) {
    %c0_i32 = arith.constant 0 : i32
    %c0_i32_0 = arith.constant 0 : i32
    %c0_i32_1 = arith.constant 0 : i32
    return %c0_i32, %c0_i32_0 : i32, i32
  }
  func.func @transform_2(%arg0: i32) -> (i32, i32) {
    %c0_i32 = arith.constant 0 : i32
    %c0_i32_0 = arith.constant 0 : i32
    %c0_i32_1 = arith.constant 0 : i32
    return %c0_i32, %c0_i32_0 : i32, i32
  }
}

</mosaic_0001>

<llo_original>
// kernel: tpu_custom_call.1
$region0: #{tpu_custom_call.1}
  #allocation0 [shape = 'u32[]', space=smem, size = 0x4, offset = 0x4, fixed_abs, tag = 'smem constant byte address 0x4 - core index']
  #allocation1 [shape = 'u32[144,128]{1,0:T(1,128)}', space=vmem, size = 0x12000, scoped, tag = 'internal scratch']
  %s0 = inlined_call_operand.vmem [shape: f32[128,16], index: 0, kind: input, shape index: {}]
  %s1 = inlined_call_operand.vmem [shape: f32[128,16], index: 1, kind: input, shape index: {}]
  %s2 = inlined_call_operand.hbm [shape: f32[1,16], index: 2, kind: output, shape index: {}]
  %s3 = sld [smem:[#allocation0]]
  $region18: #{tpu_custom_call.1} parent=0
    _
  %s5 = ssub.s32 1, %s3
  %s6 = scalar_select 0, %s5, %s3
  $region1: #{tpu_custom_call.1} parent=0
    #allocation2 [shape = 'u8[512]{0}', space=vmem, size = 0x400, scoped, tag = 'output window, operand 0, single buffered']
    #allocation3 [shape = 's32[1]{0}', space=sflag, size = 0x4, scoped, tag = 'scoped memory for tpu_custom_call.1']
    %7 = vsyncpa [#allocation3], 0
    // Predicated region
    $region2: #{tpu_custom_call.1} parent=1 // pred_check
      _
    $region3: #{tpu_custom_call.1} parent=1 // pred_check_branch
      %9 = sbr.rel (0) target = $region5
    $region4: #{tpu_custom_call.1} parent=1 // pred_region
      _
    $region5: #{tpu_custom_call.1} parent=1 // pred_fallthru
      _
    // Predicated region
    $region6: #{tpu_custom_call.1} parent=1 // pred_check
      _
    $region7: #{tpu_custom_call.1} parent=1 // pred_check_branch
      %11 = sbr.rel (0) target = $region9
    $region8: #{tpu_custom_call.1} parent=1 // pred_region
      _
    $region9: #{tpu_custom_call.1} parent=1 // pred_fallthru
      _
    %v12 = vld [vmem:[%s0] sm:$0xff]
    %v13 = vld [vmem:[%s0 + $0x8] sm:$0xff]
    %v14 = vld [vmem:[%s0 + $0x10] sm:$0xff]
    %v15 = vld [vmem:[%s0 + $0x18] sm:$0xff]
    %v16 = vld [vmem:[%s0 + $0x20] sm:$0xff]
    %v17 = vld [vmem:[%s0 + $0x28] sm:$0xff]
    %v18 = vld [vmem:[%s0 + $0x30] sm:$0xff]
    %v19 = vld [vmem:[%s0 + $0x38] sm:$0xff]
    %v20 = vld [vmem:[%s0 + $0x40] sm:$0xff]
    %v21 = vld [vmem:[%s0 + $0x48] sm:$0xff]
    %v22 = vld [vmem:[%s0 + $0x50] sm:$0xff]
    %v23 = vld [vmem:[%s0 + $0x58] sm:$0xff]
    %v24 = vld [vmem:[%s0 + $0x60] sm:$0xff]
    %v25 = vld [vmem:[%s0 + $0x68] sm:$0xff]
    %v26 = vld [vmem:[%s0 + $0x70] sm:$0xff]
    %v27 = vld [vmem:[%s0 + $0x78] sm:$0xff]
    %v28 = vld [vmem:[%s1] sm:$0xff]
    %v29 = vld [vmem:[%s1 + $0x8] sm:$0xff]
    %v30 = vld [vmem:[%s1 + $0x10] sm:$0xff]
    %v31 = vld [vmem:[%s1 + $0x18] sm:$0xff]
    %v32 = vld [vmem:[%s1 + $0x20] sm:$0xff]
    %v33 = vld [vmem:[%s1 + $0x28] sm:$0xff]
    %v34 = vld [vmem:[%s1 + $0x30] sm:$0xff]
    %v35 = vld [vmem:[%s1 + $0x38] sm:$0xff]
    %v36 = vld [vmem:[%s1 + $0x40] sm:$0xff]
    %v37 = vld [vmem:[%s1 + $0x48] sm:$0xff]
    %v38 = vld [vmem:[%s1 + $0x50] sm:$0xff]
    %v39 = vld [vmem:[%s1 + $0x58] sm:$0xff]
    %v40 = vld [vmem:[%s1 + $0x60] sm:$0xff]
    %v41 = vld [vmem:[%s1 + $0x68] sm:$0xff]
    %v42 = vld [vmem:[%s1 + $0x70] sm:$0xff]
    %v43 = vld [vmem:[%s1 + $0x78] sm:$0xff]
    %v44 = vsub.f32 %v12, %v28
    %v45 = vsub.f32 %v13, %v29
    %v46 = vsub.f32 %v14, %v30
    %v47 = vsub.f32 %v15, %v31
    %v48 = vsub.f32 %v16, %v32
    %v49 = vsub.f32 %v17, %v33
    %v50 = vsub.f32 %v18, %v34
    %v51 = vsub.f32 %v19, %v35
    %v52 = vsub.f32 %v20, %v36
    %v53 = vsub.f32 %v21, %v37
    %v54 = vsub.f32 %v22, %v38
    %v55 = vsub.f32 %v23, %v39
    %v56 = vsub.f32 %v24, %v40
    %v57 = vsub.f32 %v25, %v41
    %v58 = vsub.f32 %v26, %v42
    %v59 = vsub.f32 %v27, %v43
    %v60 = vmul.f32 %v44, %v44
    %v61 = vmul.f32 %v45, %v45
    %v62 = vmul.f32 %v46, %v46
    %v63 = vmul.f32 %v47, %v47
    %v64 = vmul.f32 %v48, %v48
    %v65 = vmul.f32 %v49, %v49
    %v66 = vmul.f32 %v50, %v50
    %v67 = vmul.f32 %v51, %v51
    %v68 = vmul.f32 %v52, %v52
    %v69 = vmul.f32 %v53, %v53
    %v70 = vmul.f32 %v54, %v54
    %v71 = vmul.f32 %v55, %v55
    %v72 = vmul.f32 %v56, %v56
    %v73 = vmul.f32 %v57, %v57
    %v74 = vmul.f32 %v58, %v58
    %v75 = vmul.f32 %v59, %v59
    %vm76 = vcmask 130048
    %v77 = vsel %vm76, %v60, 0.0
    %v78 = vsel %vm76, %v61, 0.0
    %v79 = vadd.f32 %v77, %v78
    %v80 = vsel %vm76, %v62, 0.0
    %v81 = vadd.f32 %v79, %v80
    %v82 = vsel %vm76, %v63, 0.0
    %v83 = vadd.f32 %v81, %v82
    %v84 = vsel %vm76, %v64, 0.0
    %v85 = vadd.f32 %v83, %v84
    %v86 = vsel %vm76, %v65, 0.0
    %v87 = vadd.f32 %v85, %v86
    %v88 = vsel %vm76, %v66, 0.0
    %v89 = vadd.f32 %v87, %v88
    %v90 = vsel %vm76, %v67, 0.0
    %v91 = vadd.f32 %v89, %v90
    %v92 = vsel %vm76, %v68, 0.0
    %v93 = vadd.f32 %v91, %v92
    %v94 = vsel %vm76, %v69, 0.0
    %v95 = vadd.f32 %v93, %v94
    %v96 = vsel %vm76, %v70, 0.0
    %v97 = vadd.f32 %v95, %v96
    %v98 = vsel %vm76, %v71, 0.0
    %v99 = vadd.f32 %v97, %v98
    %v100 = vsel %vm76, %v72, 0.0
    %v101 = vadd.f32 %v99, %v100
    %v102 = vsel %vm76, %v73, 0.0
    %v103 = vadd.f32 %v101, %v102
    %v104 = vsel %vm76, %v74, 0.0
    %v105 = vadd.f32 %v103, %v104
    %v106 = vsel %vm76, %v75, 0.0
    %v107 = vadd.f32 %v105, %v106
    %v108 = vrot.slane %v107, 4
    %v109 = vadd.f32 %v107, %v108
    %v110 = vrot.slane %v109, 2
    %v111 = vadd.f32 %v109, %v110
    %v112 = vrot.slane %v111, 1
    %v113 = vadd.f32 %v111, %v112
    %vm114 = vcmask 122880
    %115 = vst.msk [vmem:[#allocation2] sm:$0x1] %vm114, %v113
    // Predicated region
    $region10: #{tpu_custom_call.1} parent=1 // pred_check
      _
    $region11: #{tpu_custom_call.1} parent=1 // pred_check_branch
      %117 = sbr.rel (0) target = $region13
    $region12: #{tpu_custom_call.1} parent=1 // pred_region
      %s119 = ssub.s32 16, 16
      %120 = vsyncadd [#allocation3], %s119
      %s122 = sshll.u32 [#allocation2], 4
      %s123 = int_to_ptr.vmem [resolvable:$true] %s122
      %125 = dma.vmem_to_hbm [thread:$0]  %s123, 16, %s2, [#allocation3]
    $region13: #{tpu_custom_call.1} parent=1 // pred_fallthru
      _
    // Predicated region
    $region14: #{tpu_custom_call.1} parent=1 // pred_check
      _
    $region15: #{tpu_custom_call.1} parent=1 // pred_check_branch
      %127 = sbr.rel (0) target = $region17
    $region16: #{tpu_custom_call.1} parent=1 // pred_region
      %128 = dma.done [#allocation3], 16
    $region17: #{tpu_custom_call.1} parent=1 // pred_fallthru
      _
    %129 = vsyncpa [#allocation3], 1

</llo_original>
